<compile_context>
chip_gen: v6e
topology: v6e:2x2x1
jax: 0.10.0
libtpu: 0.0.40
codegen_flags: <defaults>
</compile_context>

<pallas_src>
import functools

import numpy as np
import jax
import jax.numpy as jnp
from jax.experimental import pallas as pl
from jax.experimental.pallas import tpu as pltpu

BN_EPS = 1e-5
LANE = 128


def _fused_kernel(x_ref, a1_ref, w2_ref, b2_ref, gamma_ref, beta_ref, mask_ref,
                  out_ref, *, inv_count):
    # x: (Cin+1, P_pad); last row is 1.0 on real columns (conv1 bias fold),
    # lane-padding columns are exactly zero.
    x = x_ref[...]
    # conv1 (1x1) + bias as a single MXU matmul: (Cout, Cin+1) @ (Cin+1, P_pad)
    v1 = jnp.dot(a1_ref[...], x, preferred_element_type=jnp.float32)   # (Cout, P_pad)

    # BatchNorm2d training-mode batch stats, one pass over the lane axis.
    # Padding lanes of v1 are exactly zero, so plain sums are correct; divide
    # by the real row count (static inv_count).
    mean = jnp.sum(v1, axis=1, keepdims=True) * inv_count               # (Cout, 1)
    ex2 = jnp.sum(v1 * v1, axis=1, keepdims=True) * inv_count
    var = ex2 - mean * mean                                             # biased variance
    g_rstd = gamma_ref[...] * jax.lax.rsqrt(var + BN_EPS)               # (Cout, 1)
    # v3 = v1 + BN(v1) fused into one per-channel scale/shift.
    v3 = v1 * (1.0 + g_rstd) + (beta_ref[...] - g_rstd * mean)

    # conv2's strided/padded spatial gather as a structured lane mask
    # (built + verified in the wrapper; zero lanes are the conv2 pad positions,
    # which then receive only the bias b2 — matching PyTorch).
    g = v3 * mask_ref[...]
    v4 = jnp.dot(w2_ref[...], g, preferred_element_type=jnp.float32)    # (Cout, P_pad)
    out_ref[...] = v3 + v4 + b2_ref[...]


def _out_size(h, stride, pad):
    return (h + 2 * pad - 1) // stride + 1


def _gather_input_rows(x_nhwc, stride, pad):
    """Strided/padded 1x1-conv input gather (tiny plain-JAX glue before the kernel)."""
    n, h, w, c = x_nhwc.shape
    ho, wo = _out_size(h, stride, pad), _out_size(w, stride, pad)
    xp = jnp.pad(x_nhwc, ((0, 0), (pad, pad), (pad, pad), (0, 0)))
    hi = jnp.arange(ho) * stride
    wi = jnp.arange(wo) * stride
    g = xp[:, hi][:, :, wi]                      # (N, Ho, Wo, C); pad taps are zero rows
    return g.reshape(n * ho * wo, c), ho, wo


def _conv2_gather_mask(n, ho, wo, stride, pad, p_pad):
    """Structured replacement for the old O(P^2) selection matrix.

    For every valid configuration of this module (Ho, Wo in {2, 3}) the
    strided/padded gather has a single in-bounds tap per batch and that tap is
    the identity position, so it degenerates to an elementwise 0/1 lane mask.
    """
    ho2, wo2 = _out_size(ho, stride, pad), _out_size(wo, stride, pad)
    assert (ho2, wo2) == (ho, wo), "v3 + v4 requires matching spatial sizes"
    m = np.zeros((1, p_pad), dtype=np.float32)
    for b in range(n):
        for oh in range(ho2):
            for ow in range(wo2):
                ih, iw = oh * stride - pad, ow * stride - pad
                if 0 <= ih < ho and 0 <= iw < wo:
                    src = b * ho * wo + ih * wo + iw
                    dst = b * ho2 * wo2 + oh * wo2 + ow
                    assert src == dst, "gather-as-mask only valid when src == dst"
                    m[0, dst] = 1.0
    return jnp.asarray(m)


def model_forward(x_nchw, w1, b1, gamma, beta, w2, b2):
    n, cin, h, w = x_nchw.shape
    cout = w1.shape[0]
    x_nhwc = jnp.transpose(x_nchw, (0, 2, 3, 1))

    xg, ho, wo = _gather_input_rows(x_nhwc, stride=2, pad=1)     # (P_real, Cin)
    p_real = n * ho * wo
    p_pad = max(LANE, ((p_real + LANE - 1) // LANE) * LANE)      # lane-dense columns

    # Channel-on-sublane input: (Cin+1, P_pad); last row = 1 on real columns
    # so conv1's bias folds into the weight matrix; padding columns stay 0.
    xT = jnp.zeros((cin + 1, p_pad), jnp.float32)
    xT = xT.at[:cin, :p_real].set(xg.T.astype(jnp.float32))
    xT = xT.at[cin, :p_real].set(1.0)

    a1 = jnp.concatenate(
        [w1.reshape(cout, cin), b1.reshape(cout, 1)], axis=1).astype(jnp.float32)
    mask = _conv2_gather_mask(n, ho, wo, 2, 1, p_pad)

    kernel = functools.partial(_fused_kernel, inv_count=1.0 / p_real)
    vmem_spec = pl.BlockSpec(memory_space=pltpu.MemorySpace.VMEM)

    outT = pl.pallas_call(
        kernel,
        out_shape=jax.ShapeDtypeStruct((cout, p_pad), jnp.float32),
        in_specs=[vmem_spec] * 7,
        out_specs=vmem_spec,
    )(
        xT,                                              # (Cin+1, P_pad)
        a1,                                              # (Cout, Cin+1)
        w2.reshape(cout, cout).astype(jnp.float32),      # (Cout, Cin2=8)
        b2.reshape(cout, 1).astype(jnp.float32),
        gamma.reshape(cout, 1).astype(jnp.float32),
        beta.reshape(cout, 1).astype(jnp.float32),
        mask,                                            # (1, P_pad)
    )

    # drop lane padding, back to NCHW
    out = outT[:, :p_real].reshape(cout, n, ho, wo)
    return jnp.transpose(out, (1, 0, 2, 3))


def _reference_forward(x, w1, b1, gamma, beta, w2, b2):
    """Plain-JAX reference matching PyTorch semantics (sanity check)."""
    def conv1x1(inp, wgt, bias):
        y = jax.lax.conv_general_dilated(
            inp, wgt, window_strides=(2, 2), padding=((1, 1), (1, 1)),
            dimension_numbers=("NCHW", "OIHW", "NCHW"))
        return y + bias.reshape(1, -1, 1, 1)

    v1 = conv1x1(x, w1, b1)
    mean = jnp.mean(v1, axis=(0, 2, 3), keepdims=True)
    var = jnp.mean((v1 - mean) ** 2, axis=(0, 2, 3), keepdims=True)
    v2 = gamma.reshape(1, -1, 1, 1) * (v1 - mean) * jax.lax.rsqrt(var + BN_EPS) \
        + beta.reshape(1, -1, 1, 1)
    v3 = v1 + v2
    v4 = conv1x1(v3, w2, b2)
    return v3 + v4


if __name__ == "__main__":
    key = jax.random.PRNGKey(0)
    k1, k2, k3, k4, k5 = jax.random.split(key, 5)

    # deterministic parameter init (synthetic, no checkpoint)
    w1 = jax.random.normal(k1, (8, 3, 1, 1), jnp.float32) * 0.1
    b1 = jax.random.normal(k2, (8,), jnp.float32) * 0.1
    w2 = jax.random.normal(k3, (8, 8, 1, 1), jnp.float32) * 0.1
    b2 = jax.random.normal(k4, (8,), jnp.float32) * 0.1
    gamma = jnp.ones((8,), jnp.float32)
    beta = jnp.zeros((8,), jnp.float32)

    # small input consistent with the forward: (N=2, C=3, H=W=4)
    x = jax.random.normal(k5, (2, 3, 4, 4), jnp.float32)

    out = model_forward(x, w1, b1, gamma, beta, w2, b2)
    out = jax.block_until_ready(out)

    ref = _reference_forward(x, w1, b1, gamma, beta, w2, b2)
    np.testing.assert_allclose(np.asarray(out), np.asarray(ref), rtol=1e-4, atol=1e-4)

    print("KERNEL_OK")
</pallas_src>

<mosaic_0001>
module attributes {stable_mosaic.version = 11 : i64} {
  func.func @_fused_kernel(%arg0: memref<4x128xf32, #tpu.memory_space<vmem>>, %arg1: memref<8x4xf32, #tpu.memory_space<vmem>>, %arg2: memref<8x8xf32, #tpu.memory_space<vmem>>, %arg3: memref<8x1xf32, #tpu.memory_space<vmem>>, %arg4: memref<8x1xf32, #tpu.memory_space<vmem>>, %arg5: memref<8x1xf32, #tpu.memory_space<vmem>>, %arg6: memref<1x128xf32, #tpu.memory_space<vmem>>, %arg7: memref<8x128xf32, #tpu.memory_space<vmem>>) attributes {dimension_semantics = [], scalar_prefetch = 0 : i64, scratch_operands = 0 : i64, tpu.core_type = #tpu.core_type<tc>} {
    %c0 = arith.constant 0 : index
    %c0_0 = arith.constant 0 : index
    %0 = vector.load %arg0[%c0, %c0_0] : memref<4x128xf32, #tpu.memory_space<vmem>>, vector<4x128xf32>
    %c0_1 = arith.constant 0 : index
    %c0_2 = arith.constant 0 : index
    %1 = vector.load %arg1[%c0_1, %c0_2] : memref<8x4xf32, #tpu.memory_space<vmem>>, vector<8x4xf32>
    %cst = arith.constant dense<0.000000e+00> : vector<8x128xf32>
    %2 = tpu.matmul %1, %0, %cst {dimension_numbers = #tpu.dot_dimension_numbers<[1], [0], [0], [1], [0, 0, 1, 1], [], []>} : vector<8x4xf32>, vector<4x128xf32>, vector<8x128xf32> -> vector<8x128xf32>
    %cst_3 = arith.constant dense<0.000000e+00> : vector<8xf32>
    %3 = vector.multi_reduction <add>, %2, %cst_3 [1] : vector<8x128xf32> to vector<8xf32>
    %4 = vector.shape_cast %3 : vector<8xf32> to vector<8x1xf32>
    %cst_4 = arith.constant 0.055555556 : f32
    %5 = vector.broadcast %cst_4 : f32 to vector<8x1xf32>
    %6 = arith.mulf %4, %5 : vector<8x1xf32>
    %7 = arith.mulf %2, %2 : vector<8x128xf32>
    %cst_5 = arith.constant dense<0.000000e+00> : vector<8xf32>
    %8 = vector.multi_reduction <add>, %7, %cst_5 [1] : vector<8x128xf32> to vector<8xf32>
    %9 = vector.shape_cast %8 : vector<8xf32> to vector<8x1xf32>
    %cst_6 = arith.constant 0.055555556 : f32
    %10 = vector.broadcast %cst_6 : f32 to vector<8x1xf32>
    %11 = arith.mulf %9, %10 : vector<8x1xf32>
    %12 = arith.mulf %6, %6 : vector<8x1xf32>
    %13 = arith.subf %11, %12 : vector<8x1xf32>
    %c0_7 = arith.constant 0 : index
    %c0_8 = arith.constant 0 : index
    %14 = vector.load %arg4[%c0_7, %c0_8] : memref<8x1xf32, #tpu.memory_space<vmem>>, vector<8x1xf32>
    %cst_9 = arith.constant 9.99999974E-6 : f32
    %15 = vector.broadcast %cst_9 : f32 to vector<8x1xf32>
    %16 = arith.addf %13, %15 : vector<8x1xf32>
    %17 = math.rsqrt %16 : vector<8x1xf32>
    %18 = arith.mulf %14, %17 : vector<8x1xf32>
    %cst_10 = arith.constant 1.000000e+00 : f32
    %19 = vector.broadcast %cst_10 : f32 to vector<8x1xf32>
    %20 = arith.addf %19, %18 : vector<8x1xf32>
    %21 = vector.broadcast %20 : vector<8x1xf32> to vector<8x128xf32>
    %22 = arith.mulf %2, %21 : vector<8x128xf32>
    %c0_11 = arith.constant 0 : index
    %c0_12 = arith.constant 0 : index
    %23 = vector.load %arg5[%c0_11, %c0_12] : memref<8x1xf32, #tpu.memory_space<vmem>>, vector<8x1xf32>
    %24 = arith.mulf %18, %6 : vector<8x1xf32>
    %25 = arith.subf %23, %24 : vector<8x1xf32>
    %26 = vector.broadcast %25 : vector<8x1xf32> to vector<8x128xf32>
    %27 = arith.addf %22, %26 : vector<8x128xf32>
    %c0_13 = arith.constant 0 : index
    %c0_14 = arith.constant 0 : index
    %28 = vector.load %arg6[%c0_13, %c0_14] : memref<1x128xf32, #tpu.memory_space<vmem>>, vector<1x128xf32>
    %29 = vector.broadcast %28 : vector<1x128xf32> to vector<8x128xf32>
    %30 = arith.mulf %27, %29 : vector<8x128xf32>
    %c0_15 = arith.constant 0 : index
    %c0_16 = arith.constant 0 : index
    %31 = vector.load %arg2[%c0_15, %c0_16] : memref<8x8xf32, #tpu.memory_space<vmem>>, vector<8x8xf32>
    %cst_17 = arith.constant dense<0.000000e+00> : vector<8x128xf32>
    %32 = tpu.matmul %31, %30, %cst_17 {dimension_numbers = #tpu.dot_dimension_numbers<[1], [0], [0], [1], [0, 0, 1, 1], [], []>} : vector<8x8xf32>, vector<8x128xf32>, vector<8x128xf32> -> vector<8x128xf32>
    %33 = arith.addf %27, %32 : vector<8x128xf32>
    %c0_18 = arith.constant 0 : index
    %c0_19 = arith.constant 0 : index
    %34 = vector.load %arg3[%c0_18, %c0_19] : memref<8x1xf32, #tpu.memory_space<vmem>>, vector<8x1xf32>
    %35 = vector.broadcast %34 : vector<8x1xf32> to vector<8x128xf32>
    %36 = arith.addf %33, %35 : vector<8x128xf32>
    %c0_20 = arith.constant 0 : index
    %c0_21 = arith.constant 0 : index
    %37 = vector.load %arg7[%c0_20, %c0_21] : memref<8x128xf32, #tpu.memory_space<vmem>>, vector<8x128xf32>
    tpu.vector_store %arg7[%c0_20, %c0_21], %36 {strides = array<i32>} : memref<8x128xf32, #tpu.memory_space<vmem>>, vector<8x128xf32>,
    return
  }
}

</mosaic_0001>

<llo_original>
// kernel: tpu_custom_call.1
$region0: #{tpu_custom_call.1}
  #allocation0 [shape = 'u32[]', space=smem, size = 0x4, offset = 0x4, fixed_abs, tag = 'smem constant byte address 0x4 - core index']
  #allocation1 [shape = 'u32[144,128]{1,0:T(1,128)}', space=vmem, size = 0x12000, scoped, tag = 'internal scratch']
  %s0 = inlined_call_operand.vmem [shape: f32[4,128], index: 0, kind: input, shape index: {}]
  %s1 = inlined_call_operand.vmem [shape: f32[8,4], index: 1, kind: input, shape index: {}]
  %s2 = inlined_call_operand.vmem [shape: f32[8,8], index: 2, kind: input, shape index: {}]
  %s3 = inlined_call_operand.vmem [shape: f32[8,1], index: 3, kind: input, shape index: {}]
  %s4 = inlined_call_operand.vmem [shape: f32[8,1], index: 4, kind: input, shape index: {}]
  %s5 = inlined_call_operand.vmem [shape: f32[8,1], index: 5, kind: input, shape index: {}]
  %s6 = inlined_call_operand.vmem [shape: f32[1,128], index: 6, kind: input, shape index: {}]
  %s7 = inlined_call_operand.hbm [shape: f32[8,128], index: 7, kind: output, shape index: {}]
  %s8 = sld [smem:[#allocation0]]
  $region38: #{tpu_custom_call.1} parent=0
    _
  %s10 = ssub.s32 1, %s8
  %s11 = scalar_select 0, %s10, %s8
  $region1: #{tpu_custom_call.1} parent=0
    #allocation2 [shape = 'u8[4096]{0}', space=vmem, size = 0x1000, scoped, tag = 'output window, operand 0, single buffered']
    #allocation3 [shape = 's32[1]{0}', space=sflag, size = 0x4, scoped, tag = 'scoped memory for tpu_custom_call.1']
    %12 = vsyncpa [#allocation3], 0
    // Predicated region
    $region2: #{tpu_custom_call.1} parent=1 // pred_check
      _
    $region3: #{tpu_custom_call.1} parent=1 // pred_check_branch
      %14 = sbr.rel (0) target = $region5
    $region4: #{tpu_custom_call.1} parent=1 // pred_region
      _
    $region5: #{tpu_custom_call.1} parent=1 // pred_fallthru
      _
    // Predicated region
    $region6: #{tpu_custom_call.1} parent=1 // pred_check
      _
    $region7: #{tpu_custom_call.1} parent=1 // pred_check_branch
      %16 = sbr.rel (0) target = $region9
    $region8: #{tpu_custom_call.1} parent=1 // pred_region
      _
    $region9: #{tpu_custom_call.1} parent=1 // pred_fallthru
      _
    // Predicated region
    $region10: #{tpu_custom_call.1} parent=1 // pred_check
      _
    $region11: #{tpu_custom_call.1} parent=1 // pred_check_branch
      %18 = sbr.rel (0) target = $region13
    $region12: #{tpu_custom_call.1} parent=1 // pred_region
      _
    $region13: #{tpu_custom_call.1} parent=1 // pred_fallthru
      _
    // Predicated region
    $region14: #{tpu_custom_call.1} parent=1 // pred_check
      _
    $region15: #{tpu_custom_call.1} parent=1 // pred_check_branch
      %20 = sbr.rel (0) target = $region17
    $region16: #{tpu_custom_call.1} parent=1 // pred_region
      _
    $region17: #{tpu_custom_call.1} parent=1 // pred_fallthru
      _
    // Predicated region
    $region18: #{tpu_custom_call.1} parent=1 // pred_check
      _
    $region19: #{tpu_custom_call.1} parent=1 // pred_check_branch
      %22 = sbr.rel (0) target = $region21
    $region20: #{tpu_custom_call.1} parent=1 // pred_region
      _
    $region21: #{tpu_custom_call.1} parent=1 // pred_fallthru
      _
    // Predicated region
    $region22: #{tpu_custom_call.1} parent=1 // pred_check
      _
    $region23: #{tpu_custom_call.1} parent=1 // pred_check_branch
      %24 = sbr.rel (0) target = $region25
    $region24: #{tpu_custom_call.1} parent=1 // pred_region
      _
    $region25: #{tpu_custom_call.1} parent=1 // pred_fallthru
      _
    // Predicated region
    $region26: #{tpu_custom_call.1} parent=1 // pred_check
      _
    $region27: #{tpu_custom_call.1} parent=1 // pred_check_branch
      %26 = sbr.rel (0) target = $region29
    $region28: #{tpu_custom_call.1} parent=1 // pred_region
      _
    $region29: #{tpu_custom_call.1} parent=1 // pred_fallthru
      _
    %v27 = vld [vmem:[%s0] sm:$0xf]
    %v28 = vld [vmem:[%s1] sm:$0xff]
    %vm29 = vcmask 31744
    %v31 = vsel %vm29, %v28, 0
    %vm33 = vcmask 1043456
    %v35 = vsel %vm33, %v27, 0
    %37 = vmatprep.subr.mxu0 0.0
    %38 = vmatpush1.msra.mxu0 0.0
    %39 = vmatprep.subr.mxu0 0.0
    %40 = vmatpush1.msra.mxu0 0.0
    %41 = vmatprep.subr.mxu0 0.0
    %42 = vmatpush1.msra.mxu0 0.0
    %43 = vmatprep.subr.mxu0 0.0
    %44 = vmatpush1.msra.mxu0 0.0
    %45 = vmatprep.subr.mxu0 0.0
    %46 = vmatpush1.msra.mxu0 0.0
    %47 = vmatprep.subr.mxu0 0.0
    %48 = vmatpush1.msra.mxu0 0.0
    %49 = vmatprep.subr.mxu0 0.0
    %50 = vmatpush1.msra.mxu0 0.0
    %51 = vmatprep.subr.mxu0 0.0
    %52 = vmatpush1.msra.mxu0 0.0
    %53 = vmatprep.subr.mxu0 0.0
    %54 = vmatpush1.msra.mxu0 0.0
    %55 = vmatprep.subr.mxu0 0.0
    %56 = vmatpush1.msra.mxu0 0.0
    %57 = vmatprep.subr.mxu0 0.0
    %58 = vmatpush1.msra.mxu0 0.0
    %59 = vmatprep.subr.mxu0 0.0
    %60 = vmatpush1.msra.mxu0 0.0
    %61 = vmatprep.subr.mxu0 0.0
    %62 = vmatpush1.msra.mxu0 0.0
    %63 = vmatprep.subr.mxu0 0.0
    %64 = vmatpush1.msra.mxu0 0.0
    %65 = vmatprep.subr.mxu0 0.0
    %66 = vmatpush1.msra.mxu0 0.0
    %67 = vmatprep.subr.mxu0 0.0
    %68 = vmatpush1.msra.mxu0 %v35
    %69 = vmatprep.subr.mxu0 0.0
    %70 = vmatpush2.msra.mxu0 0.0
    %71 = vmatprep.subr.mxu0 0.0
    %72 = vmatpush2.msra.mxu0 0.0
    %73 = vmatprep.subr.mxu0 0.0
    %74 = vmatpush2.msra.mxu0 0.0
    %75 = vmatprep.subr.mxu0 0.0
    %76 = vmatpush2.msra.mxu0 0.0
    %77 = vmatprep.subr.mxu0 0.0
    %78 = vmatpush2.msra.mxu0 0.0
    %79 = vmatprep.subr.mxu0 0.0
    %80 = vmatpush2.msra.mxu0 0.0
    %81 = vmatprep.subr.mxu0 0.0
    %82 = vmatpush2.msra.mxu0 0.0
    %83 = vmatprep.subr.mxu0 0.0
    %84 = vmatpush2.msra.mxu0 0.0
    %85 = vmatprep.subr.mxu0 0.0
    %86 = vmatpush2.msra.mxu0 0.0
    %87 = vmatprep.subr.mxu0 0.0
    %88 = vmatpush2.msra.mxu0 0.0
    %89 = vmatprep.subr.mxu0 0.0
    %90 = vmatpush2.msra.mxu0 0.0
    %91 = vmatprep.subr.mxu0 0.0
    %92 = vmatpush2.msra.mxu0 0.0
    %93 = vmatprep.subr.mxu0 0.0
    %94 = vmatpush2.msra.mxu0 0.0
    %95 = vmatprep.subr.mxu0 0.0
    %96 = vmatpush2.msra.mxu0 0.0
    %97 = vmatprep.subr.mxu0 0.0
    %98 = vmatpush2.msra.mxu0 0.0
    %99 = vmatprep.subr.mxu0 0.0
    %100 = vmatpush2.msra.mxu0 0.0
    %101 = vmatprep.mubr.f32.mxu0 0.0
    %102 = vmatmul.mubr.f32.gmra.mxu0 %v31
    %v103 = vpop.f32.mrf.mxu0
    %v104 = vadd.f32 0.0, %v103
    %v105 = vpop.f32.mrf.mxu0
    %106 = vdwg.mxu0
    %107 = vadd.xlane.f32.xlu0 %v104
    %v108 = vpop.xlane.xlu0 %107
    %v109 = vmul.f32 %v108, 0.055555556
    %v110 = vmul.f32 %v104, %v104
    %111 = vadd.xlane.f32.xlu0 %v110
    %v112 = vpop.xlane.xlu0 %111
    %v113 = vmul.f32 %v112, 0.055555556
    %v114 = vmul.f32 %v109, %v109
    %v115 = vsub.f32 %v113, %v114
    %v116 = vld [vmem:[%s4] sm:$0xff]
    %v117 = vadd.f32 %v115, 1e-05
    %v118 = vrsqrt.pop %v117
    %v119 = vmul.f32 %v116, %v118
    %v120 = vadd.f32 %v119, 1.0
    %122 = vset.pattern.permute.xlu0 0
    %123 = vperm.xlu0 %122, %v120
    %v124 = vpop.permute.xlu0 %123
    %v126 = vmul.f32 %v104, %v124
    %v127 = vld [vmem:[%s5] sm:$0xff]
    %v128 = vmul.f32 %v119, %v109
    %v129 = vsub.f32 %v127, %v128
    %131 = vset.pattern.permute.xlu0 0
    %132 = vperm.xlu0 %131, %v129
    %v133 = vpop.permute.xlu0 %132
    %v135 = vadd.f32 %v126, %v133
    %v136 = vld [vmem:[%s6] sm:$0x1]
    %v138 = vlaneseq
    %v139 = vshrl.u32 %v138, 7
    %v140 = vsub.s32 0, %v139
    %v141 = vrot.slane %v136, %v140
    %v143 = vmul.f32 %v135, %v141
    %v144 = vld [vmem:[%s2] sm:$0xff]
    %vm145 = vcmask 64512
    %v147 = vsel %vm145, %v144, 0
    %149 = vmatprep.subr.mxu0 0.0
    %150 = vmatpush1.msra.mxu0 0.0
    %151 = vmatprep.subr.mxu0 0.0
    %152 = vmatpush1.msra.mxu0 0.0
    %153 = vmatprep.subr.mxu0 0.0
    %154 = vmatpush1.msra.mxu0 0.0
    %155 = vmatprep.subr.mxu0 0.0
    %156 = vmatpush1.msra.mxu0 0.0
    %157 = vmatprep.subr.mxu0 0.0
    %158 = vmatpush1.msra.mxu0 0.0
    %159 = vmatprep.subr.mxu0 0.0
    %160 = vmatpush1.msra.mxu0 0.0
    %161 = vmatprep.subr.mxu0 0.0
    %162 = vmatpush1.msra.mxu0 0.0
    %163 = vmatprep.subr.mxu0 0.0
    %164 = vmatpush1.msra.mxu0 0.0
    %165 = vmatprep.subr.mxu0 0.0
    %166 = vmatpush1.msra.mxu0 0.0
    %167 = vmatprep.subr.mxu0 0.0
    %168 = vmatpush1.msra.mxu0 0.0
    %169 = vmatprep.subr.mxu0 0.0
    %170 = vmatpush1.msra.mxu0 0.0
    %171 = vmatprep.subr.mxu0 0.0
    %172 = vmatpush1.msra.mxu0 0.0
    %173 = vmatprep.subr.mxu0 0.0
    %174 = vmatpush1.msra.mxu0 0.0
    %175 = vmatprep.subr.mxu0 0.0
    %176 = vmatpush1.msra.mxu0 0.0
    %177 = vmatprep.subr.mxu0 0.0
    %178 = vmatpush1.msra.mxu0 0.0
    %179 = vmatprep.subr.mxu0 0.0
    %180 = vmatpush1.msra.mxu0 %v143
    %181 = vmatprep.subr.mxu0 0.0
    %182 = vmatpush2.msra.mxu0 0.0
    %183 = vmatprep.subr.mxu0 0.0
    %184 = vmatpush2.msra.mxu0 0.0
    %185 = vmatprep.subr.mxu0 0.0
    %186 = vmatpush2.msra.mxu0 0.0
    %187 = vmatprep.subr.mxu0 0.0
    %188 = vmatpush2.msra.mxu0 0.0
    %189 = vmatprep.subr.mxu0 0.0
    %190 = vmatpush2.msra.mxu0 0.0
    %191 = vmatprep.subr.mxu0 0.0
    %192 = vmatpush2.msra.mxu0 0.0
    %193 = vmatprep.subr.mxu0 0.0
    %194 = vmatpush2.msra.mxu0 0.0
    %195 = vmatprep.subr.mxu0 0.0
    %196 = vmatpush2.msra.mxu0 0.0
    %197 = vmatprep.subr.mxu0 0.0
    %198 = vmatpush2.msra.mxu0 0.0
    %199 = vmatprep.subr.mxu0 0.0
    %200 = vmatpush2.msra.mxu0 0.0
    %201 = vmatprep.subr.mxu0 0.0
    %202 = vmatpush2.msra.mxu0 0.0
    %203 = vmatprep.subr.mxu0 0.0
    %204 = vmatpush2.msra.mxu0 0.0
    %205 = vmatprep.subr.mxu0 0.0
    %206 = vmatpush2.msra.mxu0 0.0
    %207 = vmatprep.subr.mxu0 0.0
    %208 = vmatpush2.msra.mxu0 0.0
    %209 = vmatprep.subr.mxu0 0.0
    %210 = vmatpush2.msra.mxu0 0.0
    %211 = vmatprep.subr.mxu0 0.0
    %212 = vmatpush2.msra.mxu0 0.0
    %213 = vmatprep.mubr.f32.mxu0 0.0
    %214 = vmatmul.mubr.f32.gmra.mxu0 %v147
    %v215 = vpop.f32.mrf.mxu0
    %v216 = vadd.f32 0.0, %v215
    %v217 = vpop.f32.mrf.mxu0
    %218 = vdwg.mxu0
    %v219 = vadd.f32 %v135, %v216
    %v220 = vld [vmem:[%s3] sm:$0xff]
    %222 = vset.pattern.permute.xlu0 0
    %223 = vperm.xlu0 %222, %v220
    %v224 = vpop.permute.xlu0 %223
    %v226 = vadd.f32 %v219, %v224
    %227 = vst [vmem:[#allocation2] sm:$0xff] %v226
    // Predicated region
    $region30: #{tpu_custom_call.1} parent=1 // pred_check
      _
    $region31: #{tpu_custom_call.1} parent=1 // pred_check_branch
      %229 = sbr.rel (0) target = $region33
    $region32: #{tpu_custom_call.1} parent=1 // pred_region
      %s231 = ssub.s32 128, 128
      %232 = vsyncadd [#allocation3], %s231
      %s234 = sshll.u32 [#allocation2], 4
      %s235 = int_to_ptr.vmem [resolvable:$true] %s234
      %237 = dma.vmem_to_hbm [thread:$0]  %s235, 128, %s7, [#allocation3]
    $region33: #{tpu_custom_call.1} parent=1 // pred_fallthru
      _
    // Predicated region
    $region34: #{tpu_custom_call.1} parent=1 // pred_check
      _
    $region35: #{tpu_custom_call.1} parent=1 // pred_check_branch
      %239 = sbr.rel (0) target = $region37
    $region36: #{tpu_custom_call.1} parent=1 // pred_region
      %240 = dma.done [#allocation3], 128
    $region37: #{tpu_custom_call.1} parent=1 // pred_fallthru
      _
    %241 = vsyncpa [#allocation3], 1

</llo_original>
